<compile_context>
chip_gen: v6e
topology: v6e:2x2x1
jax: 0.10.0
libtpu: 0.0.40
codegen_flags: <defaults>
</compile_context>

<pallas_src>
import math
from functools import partial

import jax
import jax.numpy as jnp
from jax.experimental import pallas as pl
from jax.experimental.pallas import tpu as pltpu

# ---- CFG constants from the PyTorch module ----
TEMPERATURE = 6.0
INV_TEMPERATURE = 1.0 / TEMPERATURE
NOISE_STD_MIN = 0.3
NOISE_STD_MAX = 1.2
CLIP_MAX = 0.6
ROUND_FACTOR = 10.0                 # 10 ** CFG.round_digit (round_digit = 1)
INV_ROUND_FACTOR = 1.0 / ROUND_FACTOR
NEG_LARGE = -1e30                   # "-inf" stand-in for padded class columns
LANES = 128                         # TPU lane width; classes padded up to this


def _round_up(x, m):
    return (x + m - 1) // m * m


def _cdiv(a, b):
    return (a + b - 1) // b


def _defence_kernel(x_ref, w_ref, b_ref, z_ref, out_ref, *, k_true):
    """One batch tile of the full MIA-defense pipeline (lane-dense classes).

    x_ref: (TN, F)  bf16   flattened inputs
    w_ref: (F, Kp)  bf16   class-padded weight (resident across the grid)
    b_ref: (1, Kp)  f32    class-padded bias
    z_ref: (TN, Kp) bf16   precomputed standard-normal noise
    out_ref: (TN, Kp) f32  sanitised logits (only first k_true columns valid)
    """
    tn, kp = out_ref.shape

    # ---- base model (eval): linear classifier, bf16 in / f32 accumulate ----
    logits = jnp.dot(x_ref[...], w_ref[...],
                     preferred_element_type=jnp.float32) + b_ref[...]

    # mask padded class columns so they never participate in softmax / sums
    valid = jax.lax.broadcasted_iota(jnp.int32, (tn, kp), 1) < k_true

    # raw_logits = base(x) / temperature
    raw = jnp.where(valid, logits * INV_TEMPERATURE, NEG_LARGE)

    # probs_tmp = softmax(raw); max_conf = max(probs_tmp) == 1 / sum(exp(raw-m1))
    m1 = jnp.max(raw, axis=1, keepdims=True)
    s1 = jnp.sum(jnp.exp(raw - m1), axis=1, keepdims=True)
    max_conf = pl.reciprocal(s1, approx=True)

    # std = std_min + (std_max - std_min) * max_conf^2
    std = NOISE_STD_MIN + (NOISE_STD_MAX - NOISE_STD_MIN) * (max_conf * max_conf)

    # noisy_logits = raw + randn_like(raw) * std  (padded lanes stay ~ -1e30:
    # finite noise cannot revive them, so no second mask is needed)
    noisy = raw + z_ref[...].astype(jnp.float32) * std

    # probs = softmax(noisy, dim=1)  (per-row reciprocal, broadcast multiply)
    m2 = jnp.max(noisy, axis=1, keepdims=True)
    e2 = jnp.exp(noisy - m2)
    probs = e2 * pl.reciprocal(jnp.sum(e2, axis=1, keepdims=True), approx=True)

    # clamp to [0, clip_max] and renormalize
    probs = jnp.clip(probs, 0.0, CLIP_MAX)
    probs = probs * pl.reciprocal(jnp.sum(probs, axis=1, keepdims=True),
                                  approx=True)

    # round to 1 decimal
    probs = jnp.round(probs * ROUND_FACTOR) * INV_ROUND_FACTOR

    # rows that rounded to all-zero -> uniform 1/K over the REAL classes only
    row_sum = jnp.sum(probs, axis=1, keepdims=True)
    valid_fix = jax.lax.broadcasted_iota(jnp.int32, (tn, kp), 1) < k_true
    uniform = jnp.where(valid_fix, 1.0 / k_true, 0.0)
    probs = jnp.where(row_sum == 0.0, uniform, probs)

    # final EXACT renormalization + sanitised logits = log(clamp(probs, 1e-6))
    probs = probs * pl.reciprocal(jnp.sum(probs, axis=1, keepdims=True),
                                  approx=False)
    out_ref[...] = jnp.log(jnp.maximum(probs, 1e-6))


def defence_forward(x_nchw, w, b, noise_key, *, batch_tile=512):
    """x_nchw: (N,C,H,W) f32; w: (F,K) f32; b: (1,K) f32; noise_key: PRNG key."""
    n = x_nchw.shape[0]
    f, k = w.shape
    kp = _round_up(k, LANES)            # exactly one 128-lane class group here

    # ---- batch tiling: multiples of 16 rows (bf16 sublane packing) ----
    npad = _round_up(max(n, 1), 16)
    tn = min(batch_tile, npad)
    # give v7x's two TensorCores at least two grid steps when the batch allows
    if npad // tn < 2 and npad >= 32:
        tn = _round_up(_cdiv(npad, 2), 16)
    npad = _round_up(npad, tn)
    grid = (npad // tn,)

    # flatten NCHW row-major (same as nn.Flatten), cast to bf16 once,
    # pad the batch only when it is actually ragged
    x2d = x_nchw.reshape(n, -1).astype(jnp.bfloat16)
    if npad != n:
        x2d = jnp.pad(x2d, ((0, npad - n), (0, 0)))

    # class-padded (lane-dense) weight / bias
    wp = w.astype(jnp.bfloat16)
    if kp != k:
        wp = jnp.pad(wp, ((0, 0), (0, kp - k)))
    bp = jnp.pad(b.astype(jnp.float32).reshape(1, k), ((0, 0), (0, kp - k)))

    # standard-normal noise (== torch.randn_like(raw_logits)); stored as bf16
    # to halve its HBM traffic, rescaled by the confidence-dependent std in f32
    # inside the kernel.
    z = jax.random.normal(noise_key, (npad, kp), dtype=jnp.bfloat16)

    kernel = partial(_defence_kernel, k_true=k)

    flops = 2 * npad * f * kp + 40 * npad * kp
    bytes_accessed = (x2d.size * 2 + wp.size * 2 + bp.size * 4
                      + z.size * 2 + npad * kp * 4)

    out = pl.pallas_call(
        kernel,
        out_shape=jax.ShapeDtypeStruct((npad, kp), jnp.float32),
        grid=grid,
        in_specs=[
            pl.BlockSpec((tn, f), lambda i: (i, 0)),    # x batch tile
            pl.BlockSpec((f, kp), lambda i: (0, 0)),    # weight, stays resident
            pl.BlockSpec((1, kp), lambda i: (0, 0)),    # bias, stays resident
            pl.BlockSpec((tn, kp), lambda i: (i, 0)),   # noise batch tile
        ],
        out_specs=pl.BlockSpec((tn, kp), lambda i: (i, 0)),
        compiler_params=pltpu.CompilerParams(
            dimension_semantics=("parallel",),          # megacore on v7x
            vmem_limit_bytes=48 * 1024 * 1024),         # fits v7x 64 MiB VMEM
        cost_estimate=pl.CostEstimate(
            flops=flops,
            transcendentals=3 * npad * kp,
            bytes_accessed=bytes_accessed),
    )(x2d, wp, bp, z)

    # drop batch padding and padded class lanes
    return out[:n, :k]


if __name__ == "__main__":
    N, C, H, W = 2, 4, 16, 16
    K = 10                      # number of classes
    F = C * H * W

    key = jax.random.PRNGKey(0)
    kx, kw, kz = jax.random.split(key, 3)
    x = jax.random.normal(kx, (N, C, H, W), dtype=jnp.float32)
    # deterministic base-model parameters (synthetic linear classifier)
    w = jax.random.normal(kw, (F, K), dtype=jnp.float32) * (1.0 / math.sqrt(F))
    b = jnp.zeros((1, K), dtype=jnp.float32)

    out = jax.block_until_ready(defence_forward(x, w, b, noise_key=kz))

    assert out.shape == (N, K)
    assert bool(jnp.all(jnp.isfinite(out)))
    # sanitised logits are log-probs of a clipped/rounded distribution
    probs = jnp.exp(out)
    assert bool(jnp.all(jnp.abs(jnp.sum(probs, axis=1) - 1.0) < 1e-3))
    print("KERNEL_OK")
</pallas_src>

<mosaic_0001>
module attributes {stable_mosaic.version = 11 : i64} {
  func.func @_defence_kernel(%arg0: i32, %arg1: memref<16x1024xbf16, #tpu.memory_space<vmem>>, %arg2: memref<1024x128xbf16, #tpu.memory_space<vmem>>, %arg3: memref<1x128xf32, #tpu.memory_space<vmem>>, %arg4: memref<16x128xbf16, #tpu.memory_space<vmem>>, %arg5: memref<16x128xf32, #tpu.memory_space<vmem>>) attributes {dimension_semantics = [#tpu.dimension_semantics<parallel>], iteration_bounds = array<i64: 1>, scalar_prefetch = 0 : i64, scratch_operands = 0 : i64, tpu.core_type = #tpu.core_type<tc>, window_params = [{transform_indices = @transform_0, window_bounds = array<i64: 16, 1024>}, {pipeline_mode = #tpu.pipeline_mode<synchronous>, transform_indices = @transform_1, window_bounds = array<i64: 1024, 128>}, {pipeline_mode = #tpu.pipeline_mode<synchronous>, transform_indices = @transform_2, window_bounds = array<i64: 1, 128>}, {transform_indices = @transform_3, window_bounds = array<i64: 16, 128>}, {transform_indices = @transform_4, window_bounds = array<i64: 16, 128>}]} {
    %c0 = arith.constant 0 : index
    %c0_0 = arith.constant 0 : index
    %0 = vector.load %arg1[%c0, %c0_0] : memref<16x1024xbf16, #tpu.memory_space<vmem>>, vector<16x1024xbf16>
    %c0_1 = arith.constant 0 : index
    %c0_2 = arith.constant 0 : index
    %1 = vector.load %arg2[%c0_1, %c0_2] : memref<1024x128xbf16, #tpu.memory_space<vmem>>, vector<1024x128xbf16>
    %cst = arith.constant dense<0.000000e+00> : vector<16x128xf32>
    %2 = tpu.matmul %0, %1, %cst {dimension_numbers = #tpu.dot_dimension_numbers<[1], [0], [0], [1], [0, 0, 1, 1], [], []>} : vector<16x1024xbf16>, vector<1024x128xbf16>, vector<16x128xf32> -> vector<16x128xf32>
    %c0_3 = arith.constant 0 : index
    %c0_4 = arith.constant 0 : index
    %3 = vector.load %arg3[%c0_3, %c0_4] : memref<1x128xf32, #tpu.memory_space<vmem>>, vector<1x128xf32>
    %4 = vector.broadcast %3 : vector<1x128xf32> to vector<16x128xf32>
    %5 = arith.addf %2, %4 : vector<16x128xf32>
    %6 = tpu.iota {dimensions = array<i32: 1>} : vector<16x128xi32>
    %c10_i32 = arith.constant 10 : i32
    %7 = vector.broadcast %c10_i32 : i32 to vector<16x128xi32>
    %8 = arith.cmpi slt, %6, %7 : vector<16x128xi32>
    %cst_5 = arith.constant 0.166666672 : f32
    %9 = vector.broadcast %cst_5 : f32 to vector<16x128xf32>
    %10 = arith.mulf %5, %9 : vector<16x128xf32>
    %cst_6 = arith.constant -1.000000e+30 : f32
    %11 = vector.broadcast %cst_6 : f32 to vector<16x128xf32>
    %12 = arith.select %8, %10, %11 : vector<16x128xi1>, vector<16x128xf32>
    %cst_7 = arith.constant dense<0xFF800000> : vector<16xf32>
    %13 = vector.multi_reduction <maximumf>, %12, %cst_7 [1] : vector<16x128xf32> to vector<16xf32>
    %14 = vector.shape_cast %13 : vector<16xf32> to vector<16x1xf32>
    %15 = vector.broadcast %14 : vector<16x1xf32> to vector<16x128xf32>
    %16 = arith.subf %12, %15 : vector<16x128xf32>
    %17 = math.exp %16 : vector<16x128xf32>
    %cst_8 = arith.constant dense<0.000000e+00> : vector<16xf32>
    %18 = vector.multi_reduction <add>, %17, %cst_8 [1] : vector<16x128xf32> to vector<16xf32>
    %19 = vector.shape_cast %18 : vector<16xf32> to vector<16x1xf32>
    %20 = tpu.reciprocal %19 {approx = true} : vector<16x1xf32> -> vector<16x1xf32>
    %21 = arith.mulf %20, %20 : vector<16x1xf32>
    %cst_9 = arith.constant 0.899999976 : f32
    %22 = vector.broadcast %cst_9 : f32 to vector<16x1xf32>
    %23 = arith.mulf %22, %21 : vector<16x1xf32>
    %cst_10 = arith.constant 3.000000e-01 : f32
    %24 = vector.broadcast %cst_10 : f32 to vector<16x1xf32>
    %25 = arith.addf %24, %23 : vector<16x1xf32>
    %c0_11 = arith.constant 0 : index
    %c0_12 = arith.constant 0 : index
    %26 = vector.load %arg4[%c0_11, %c0_12] : memref<16x128xbf16, #tpu.memory_space<vmem>>, vector<16x128xbf16>
    %27 = arith.extf %26 : vector<16x128xbf16> to vector<16x128xf32>
    %28 = vector.broadcast %25 : vector<16x1xf32> to vector<16x128xf32>
    %29 = arith.mulf %27, %28 : vector<16x128xf32>
    %30 = arith.addf %12, %29 : vector<16x128xf32>
    %cst_13 = arith.constant dense<0xFF800000> : vector<16xf32>
    %31 = vector.multi_reduction <maximumf>, %30, %cst_13 [1] : vector<16x128xf32> to vector<16xf32>
    %32 = vector.shape_cast %31 : vector<16xf32> to vector<16x1xf32>
    %33 = vector.broadcast %32 : vector<16x1xf32> to vector<16x128xf32>
    %34 = arith.subf %30, %33 : vector<16x128xf32>
    %35 = math.exp %34 : vector<16x128xf32>
    %cst_14 = arith.constant dense<0.000000e+00> : vector<16xf32>
    %36 = vector.multi_reduction <add>, %35, %cst_14 [1] : vector<16x128xf32> to vector<16xf32>
    %37 = vector.shape_cast %36 : vector<16xf32> to vector<16x1xf32>
    %38 = tpu.reciprocal %37 {approx = true} : vector<16x1xf32> -> vector<16x1xf32>
    %39 = vector.broadcast %38 : vector<16x1xf32> to vector<16x128xf32>
    %40 = arith.mulf %35, %39 : vector<16x128xf32>
    %cst_15 = arith.constant 0.000000e+00 : f32
    %cst_16 = arith.constant 6.000000e-01 : f32
    %41 = vector.broadcast %cst_15 : f32 to vector<16x128xf32>
    %42 = arith.maximumf %41, %40 : vector<16x128xf32>
    %43 = vector.broadcast %cst_16 : f32 to vector<16x128xf32>
    %44 = arith.minimumf %43, %42 : vector<16x128xf32>
    %cst_17 = arith.constant dense<0.000000e+00> : vector<16xf32>
    %45 = vector.multi_reduction <add>, %44, %cst_17 [1] : vector<16x128xf32> to vector<16xf32>
    %46 = vector.shape_cast %45 : vector<16xf32> to vector<16x1xf32>
    %47 = tpu.reciprocal %46 {approx = true} : vector<16x1xf32> -> vector<16x1xf32>
    %48 = vector.broadcast %47 : vector<16x1xf32> to vector<16x128xf32>
    %49 = arith.mulf %44, %48 : vector<16x128xf32>
    %cst_18 = arith.constant 1.000000e+01 : f32
    %50 = vector.broadcast %cst_18 : f32 to vector<16x128xf32>
    %51 = arith.mulf %49, %50 : vector<16x128xf32>
    %52 = math.roundeven %51 : vector<16x128xf32>
    %cst_19 = arith.constant 1.000000e-01 : f32
    %53 = vector.broadcast %cst_19 : f32 to vector<16x128xf32>
    %54 = arith.mulf %52, %53 : vector<16x128xf32>
    %cst_20 = arith.constant dense<0.000000e+00> : vector<16xf32>
    %55 = vector.multi_reduction <add>, %54, %cst_20 [1] : vector<16x128xf32> to vector<16xf32>
    %56 = vector.shape_cast %55 : vector<16xf32> to vector<16x1xf32>
    %57 = tpu.iota {dimensions = array<i32: 1>} : vector<16x128xi32>
    %c10_i32_21 = arith.constant 10 : i32
    %58 = vector.broadcast %c10_i32_21 : i32 to vector<16x128xi32>
    %59 = arith.cmpi slt, %57, %58 : vector<16x128xi32>
    %cst_22 = arith.constant 1.000000e-01 : f32
    %cst_23 = arith.constant 0.000000e+00 : f32
    %60 = vector.broadcast %cst_22 : f32 to vector<16x128xf32>
    %61 = vector.broadcast %cst_23 : f32 to vector<16x128xf32>
    %62 = arith.select %59, %60, %61 : vector<16x128xi1>, vector<16x128xf32>
    %cst_24 = arith.constant 0.000000e+00 : f32
    %63 = vector.broadcast %cst_24 : f32 to vector<16x1xf32>
    %64 = arith.cmpf oeq, %56, %63 : vector<16x1xf32>
    %65 = vector.shape_cast %64 : vector<16x1xi1> to vector<16x1xi1>
    %66 = vector.broadcast %65 : vector<16x1xi1> to vector<16x128xi1>
    %67 = arith.select %66, %62, %54 : vector<16x128xi1>, vector<16x128xf32>
    %cst_25 = arith.constant dense<0.000000e+00> : vector<16xf32>
    %68 = vector.multi_reduction <add>, %67, %cst_25 [1] : vector<16x128xf32> to vector<16xf32>
    %69 = vector.shape_cast %68 : vector<16xf32> to vector<16x1xf32>
    %70 = tpu.reciprocal %69 : vector<16x1xf32> -> vector<16x1xf32>
    %71 = vector.broadcast %70 : vector<16x1xf32> to vector<16x128xf32>
    %72 = arith.mulf %67, %71 : vector<16x128xf32>
    %cst_26 = arith.constant 9.99999997E-7 : f32
    %73 = vector.broadcast %cst_26 : f32 to vector<16x128xf32>
    %74 = arith.maximumf %72, %73 : vector<16x128xf32>
    %75 = math.log %74 : vector<16x128xf32>
    %c0_27 = arith.constant 0 : index
    %c0_28 = arith.constant 0 : index
    %76 = vector.load %arg5[%c0_27, %c0_28] : memref<16x128xf32, #tpu.memory_space<vmem>>, vector<16x128xf32>
    tpu.vector_store %arg5[%c0_27, %c0_28], %75 {strides = array<i32>} : memref<16x128xf32, #tpu.memory_space<vmem>>, vector<16x128xf32>,
    return
  }
  func.func @transform_0(%arg0: i32) -> (i32, i32) {
    %c0_i32 = arith.constant 0 : i32
    %c0_i32_0 = arith.constant 0 : i32
    return %arg0, %c0_i32 : i32, i32
  }
  func.func @transform_1(%arg0: i32) -> (i32, i32) {
    %c0_i32 = arith.constant 0 : i32
    %c0_i32_0 = arith.constant 0 : i32
    %c0_i32_1 = arith.constant 0 : i32
    return %c0_i32, %c0_i32_0 : i32, i32
  }
  func.func @transform_2(%arg0: i32) -> (i32, i32) {
    %c0_i32 = arith.constant 0 : i32
    %c0_i32_0 = arith.constant 0 : i32
    %c0_i32_1 = arith.constant 0 : i32
    return %c0_i32, %c0_i32_0 : i32, i32
  }
  func.func @transform_3(%arg0: i32) -> (i32, i32) {
    %c0_i32 = arith.constant 0 : i32
    %c0_i32_0 = arith.constant 0 : i32
    return %arg0, %c0_i32 : i32, i32
  }
  func.func @transform_4(%arg0: i32) -> (i32, i32) {
    %c0_i32 = arith.constant 0 : i32
    %c0_i32_0 = arith.constant 0 : i32
    return %arg0, %c0_i32 : i32, i32
  }
}

</mosaic_0001>

<llo_original>
// kernel: tpu_custom_call.1
$region0: #{tpu_custom_call.1}
  #allocation0 [shape = 'u32[]', space=smem, size = 0x4, offset = 0x4, fixed_abs, tag = 'smem constant byte address 0x4 - core index']
  #allocation1 [shape = 'u32[144,128]{1,0:T(1,128)}', space=vmem, size = 0x12000, scoped, tag = 'internal scratch']
  %s0 = inlined_call_operand.hbm [shape: bf16[16,1024], index: 0, kind: input, shape index: {}]
  %s1 = inlined_call_operand.hbm [shape: bf16[1024,128], index: 1, kind: input, shape index: {}]
  %s2 = inlined_call_operand.vmem [shape: f32[1,128], index: 2, kind: input, shape index: {}]
  %s3 = inlined_call_operand.hbm [shape: bf16[16,128], index: 3, kind: input, shape index: {}]
  %s4 = inlined_call_operand.hbm [shape: f32[16,128], index: 4, kind: output, shape index: {}]
  %s5 = sld [smem:[#allocation0]]
  $region38: #{tpu_custom_call.1} parent=0
    _
  %s7 = ssub.s32 1, %s5
  %s8 = scalar_select 0, %s7, %s5
  $region1: #{tpu_custom_call.1} parent=0
    #allocation2 [shape = 'u8[32768]{0}', space=vmem, size = 0x8000, scoped, tag = 'input window, operand 0, single buffered']
    #allocation3 [shape = 's32[1]{0}', space=sflag, size = 0x4, scoped, tag = 'scoped memory for tpu_custom_call.1']
    #allocation4 [shape = 's32[1]{0}', space=sflag, size = 0x4, scoped, tag = 'scoped memory for tpu_custom_call.1']
    #allocation5 [shape = 'u8[262144]{0}', space=vmem, size = 0x40000, scoped, tag = 'input window, operand 1, single buffered']
    #allocation6 [shape = 's32[1]{0}', space=sflag, size = 0x4, scoped, tag = 'scoped memory for tpu_custom_call.1']
    #allocation7 [shape = 'u8[4096]{0}', space=vmem, size = 0x1000, scoped, tag = 'input window, operand 3, single buffered']
    #allocation8 [shape = 'u8[8192]{0}', space=vmem, size = 0x2000, scoped, tag = 'output window, operand 0, single buffered']
    %9 = vsyncpa [#allocation3], 0
    %10 = vsyncpa [#allocation6], 0
    %11 = vsyncpa [#allocation4], 0
    // Predicated region
    $region2: #{tpu_custom_call.1} parent=1 // pred_check
      _
    $region3: #{tpu_custom_call.1} parent=1 // pred_check_branch
      %13 = sbr.rel (0) target = $region5
    $region4: #{tpu_custom_call.1} parent=1 // pred_region
      %s15 = ssub.s32 1024, 1024
      %16 = vsyncadd [#allocation3], %s15
      %s17 = sshll.u32 [#allocation2], 4
      %s18 = int_to_ptr.vmem [resolvable:$true] %s17
      %23 = dma.hbm_to_vmem [thread:$0]  %s0, 1024, %s18, [#allocation3], 512, 512, 32
    $region5: #{tpu_custom_call.1} parent=1 // pred_fallthru
      _
    // Predicated region
    $region6: #{tpu_custom_call.1} parent=1 // pred_check
      _
    $region7: #{tpu_custom_call.1} parent=1 // pred_check_branch
      %25 = sbr.rel (0) target = $region9
    $region8: #{tpu_custom_call.1} parent=1 // pred_region
      %s27 = ssub.s32 8192, 8192
      %28 = vsyncadd [#allocation6], %s27
      %s29 = sshll.u32 [#allocation5], 4
      %s30 = int_to_ptr.vmem [resolvable:$true] %s29
      %35 = dma.hbm_to_vmem [thread:$0]  %s1, 8192, %s30, [#allocation6], 64, 64, 4
    $region9: #{tpu_custom_call.1} parent=1 // pred_fallthru
      _
    // Predicated region
    $region10: #{tpu_custom_call.1} parent=1 // pred_check
      _
    $region11: #{tpu_custom_call.1} parent=1 // pred_check_branch
      %37 = sbr.rel (0) target = $region13
    $region12: #{tpu_custom_call.1} parent=1 // pred_region
      _
    $region13: #{tpu_custom_call.1} parent=1 // pred_fallthru
      _
    // Predicated region
    $region14: #{tpu_custom_call.1} parent=1 // pred_check
      _
    $region15: #{tpu_custom_call.1} parent=1 // pred_check_branch
      %39 = sbr.rel (0) target = $region17
    $region16: #{tpu_custom_call.1} parent=1 // pred_region
      %s41 = ssub.s32 128, 128
      %42 = vsyncadd [#allocation6], %s41
      %s43 = sshll.u32 [#allocation7], 4
      %s44 = int_to_ptr.vmem [resolvable:$true] %s43
      %49 = dma.hbm_to_vmem [thread:$0]  %s3, 128, %s44, [#allocation6], 64, 64, 4
    $region17: #{tpu_custom_call.1} parent=1 // pred_fallthru
      _
    // Predicated region
    $region18: #{tpu_custom_call.1} parent=1 // pred_check
      _
    $region19: #{tpu_custom_call.1} parent=1 // pred_check_branch
      %51 = sbr.rel (0) target = $region21
    $region20: #{tpu_custom_call.1} parent=1 // pred_region
      %52 = dma.done [#allocation3], 1024
    $region21: #{tpu_custom_call.1} parent=1 // pred_fallthru
      _
    // Predicated region
    $region22: #{tpu_custom_call.1} parent=1 // pred_check
      _
    $region23: #{tpu_custom_call.1} parent=1 // pred_check_branch
      %54 = sbr.rel (0) target = $region25
    $region24: #{tpu_custom_call.1} parent=1 // pred_region
      %55 = dma.done [#allocation6], 8192
    $region25: #{tpu_custom_call.1} parent=1 // pred_fallthru
      _
    // Predicated region
    $region26: #{tpu_custom_call.1} parent=1 // pred_check
      _
    $region27: #{tpu_custom_call.1} parent=1 // pred_check_branch
      %57 = sbr.rel (0) target = $region29
    $region28: #{tpu_custom_call.1} parent=1 // pred_region
      %58 = dma.done [#allocation6], 128
    $region29: #{tpu_custom_call.1} parent=1 // pred_fallthru
      _
    %v60 = vld [vmem:[#allocation2] sm:$0xff]
    %v61 = vld [vmem:[#allocation2 + $0x8] sm:$0xff]
    %v62 = vld [vmem:[#allocation2 + $0x10] sm:$0xff]
    %v63 = vld [vmem:[#allocation2 + $0x18] sm:$0xff]
    %v64 = vld [vmem:[#allocation2 + $0x20] sm:$0xff]
    %v65 = vld [vmem:[#allocation2 + $0x28] sm:$0xff]
    %v66 = vld [vmem:[#allocation2 + $0x30] sm:$0xff]
    %v67 = vld [vmem:[#allocation2 + $0x38] sm:$0xff]
    %v68 = vld [vmem:[#allocation5] sm:$0xf]
    %v69 = vld [vmem:[#allocation5 + $0x4] sm:$0xf]
    %v70 = vld [vmem:[#allocation5 + $0x8] sm:$0xf]
    %v71 = vld [vmem:[#allocation5 + $0xc] sm:$0xf]
    %v72 = vld [vmem:[#allocation5 + $0x10] sm:$0xf]
    %v73 = vld [vmem:[#allocation5 + $0x14] sm:$0xf]
    %v74 = vld [vmem:[#allocation5 + $0x18] sm:$0xf]
    %v75 = vld [vmem:[#allocation5 + $0x1c] sm:$0xf]
    %v76 = vld [vmem:[#allocation5 + $0x20] sm:$0xf]
    %v77 = vld [vmem:[#allocation5 + $0x24] sm:$0xf]
    %v78 = vld [vmem:[#allocation5 + $0x28] sm:$0xf]
    %v79 = vld [vmem:[#allocation5 + $0x2c] sm:$0xf]
    %v80 = vld [vmem:[#allocation5 + $0x30] sm:$0xf]
    %v81 = vld [vmem:[#allocation5 + $0x34] sm:$0xf]
    %v82 = vld [vmem:[#allocation5 + $0x38] sm:$0xf]
    %v83 = vld [vmem:[#allocation5 + $0x3c] sm:$0xf]
    %v84 = vld [vmem:[#allocation5 + $0x40] sm:$0xf]
    %v85 = vld [vmem:[#allocation5 + $0x44] sm:$0xf]
    %v86 = vld [vmem:[#allocation5 + $0x48] sm:$0xf]
    %v87 = vld [vmem:[#allocation5 + $0x4c] sm:$0xf]
    %v88 = vld [vmem:[#allocation5 + $0x50] sm:$0xf]
    %v89 = vld [vmem:[#allocation5 + $0x54] sm:$0xf]
    %v90 = vld [vmem:[#allocation5 + $0x58] sm:$0xf]
    %v91 = vld [vmem:[#allocation5 + $0x5c] sm:$0xf]
    %v92 = vld [vmem:[#allocation5 + $0x60] sm:$0xf]
    %v93 = vld [vmem:[#allocation5 + $0x64] sm:$0xf]
    %v94 = vld [vmem:[#allocation5 + $0x68] sm:$0xf]
    %v95 = vld [vmem:[#allocation5 + $0x6c] sm:$0xf]
    %v96 = vld [vmem:[#allocation5 + $0x70] sm:$0xf]
    %v97 = vld [vmem:[#allocation5 + $0x74] sm:$0xf]
    %v98 = vld [vmem:[#allocation5 + $0x78] sm:$0xf]
    %v99 = vld [vmem:[#allocation5 + $0x7c] sm:$0xf]
    %v100 = vld [vmem:[#allocation5 + $0x80] sm:$0xf]
    %v101 = vld [vmem:[#allocation5 + $0x84] sm:$0xf]
    %v102 = vld [vmem:[#allocation5 + $0x88] sm:$0xf]
    %v103 = vld [vmem:[#allocation5 + $0x8c] sm:$0xf]
    %v104 = vld [vmem:[#allocation5 + $0x90] sm:$0xf]
    %v105 = vld [vmem:[#allocation5 + $0x94] sm:$0xf]
    %v106 = vld [vmem:[#allocation5 + $0x98] sm:$0xf]
    %v107 = vld [vmem:[#allocation5 + $0x9c] sm:$0xf]
    %v108 = vld [vmem:[#allocation5 + $0xa0] sm:$0xf]
    %v109 = vld [vmem:[#allocation5 + $0xa4] sm:$0xf]
    %v110 = vld [vmem:[#allocation5 + $0xa8] sm:$0xf]
    %v111 = vld [vmem:[#allocation5 + $0xac] sm:$0xf]
    %v112 = vld [vmem:[#allocation5 + $0xb0] sm:$0xf]
    %v113 = vld [vmem:[#allocation5 + $0xb4] sm:$0xf]
    %v114 = vld [vmem:[#allocation5 + $0xb8] sm:$0xf]
    %v115 = vld [vmem:[#allocation5 + $0xbc] sm:$0xf]
    %v116 = vld [vmem:[#allocation5 + $0xc0] sm:$0xf]
    %v117 = vld [vmem:[#allocation5 + $0xc4] sm:$0xf]
    %v118 = vld [vmem:[#allocation5 + $0xc8] sm:$0xf]
    %v119 = vld [vmem:[#allocation5 + $0xcc] sm:$0xf]
    %v120 = vld [vmem:[#allocation5 + $0xd0] sm:$0xf]
    %v121 = vld [vmem:[#allocation5 + $0xd4] sm:$0xf]
    %v122 = vld [vmem:[#allocation5 + $0xd8] sm:$0xf]
    %v123 = vld [vmem:[#allocation5 + $0xdc] sm:$0xf]
    %v124 = vld [vmem:[#allocation5 + $0xe0] sm:$0xf]
    %v125 = vld [vmem:[#allocation5 + $0xe4] sm:$0xf]
    %v126 = vld [vmem:[#allocation5 + $0xe8] sm:$0xf]
    %v127 = vld [vmem:[#allocation5 + $0xec] sm:$0xf]
    %v128 = vld [vmem:[#allocation5 + $0xf0] sm:$0xf]
    %v129 = vld [vmem:[#allocation5 + $0xf4] sm:$0xf]
    %v130 = vld [vmem:[#allocation5 + $0xf8] sm:$0xf]
    %v131 = vld [vmem:[#allocation5 + $0xfc] sm:$0xf]
    %v132 = vld [vmem:[#allocation5 + $0x100] sm:$0xf]
    %v133 = vld [vmem:[#allocation5 + $0x104] sm:$0xf]
    %v134 = vld [vmem:[#allocation5 + $0x108] sm:$0xf]
    %v135 = vld [vmem:[#allocation5 + $0x10c] sm:$0xf]
    %v136 = vld [vmem:[#allocation5 + $0x110] sm:$0xf]
    %v137 = vld [vmem:[#allocation5 + $0x114] sm:$0xf]
    %v138 = vld [vmem:[#allocation5 + $0x118] sm:$0xf]
    %v139 = vld [vmem:[#allocation5 + $0x11c] sm:$0xf]
    %v140 = vld [vmem:[#allocation5 + $0x120] sm:$0xf]
    %v141 = vld [vmem:[#allocation5 + $0x124] sm:$0xf]
    %v142 = vld [vmem:[#allocation5 + $0x128] sm:$0xf]
    %v143 = vld [vmem:[#allocation5 + $0x12c] sm:$0xf]
    %v144 = vld [vmem:[#allocation5 + $0x130] sm:$0xf]
    %v145 = vld [vmem:[#allocation5 + $0x134] sm:$0xf]
    %v146 = vld [vmem:[#allocation5 + $0x138] sm:$0xf]
    %v147 = vld [vmem:[#allocation5 + $0x13c] sm:$0xf]
    %v148 = vld [vmem:[#allocation5 + $0x140] sm:$0xf]
    %v149 = vld [vmem:[#allocation5 + $0x144] sm:$0xf]
    %v150 = vld [vmem:[#allocation5 + $0x148] sm:$0xf]
    %v151 = vld [vmem:[#allocation5 + $0x14c] sm:$0xf]
    %v152 = vld [vmem:[#allocation5 + $0x150] sm:$0xf]
    %v153 = vld [vmem:[#allocation5 + $0x154] sm:$0xf]
    %v154 = vld [vmem:[#allocation5 + $0x158] sm:$0xf]
    %v155 = vld [vmem:[#allocation5 + $0x15c] sm:$0xf]
    %v156 = vld [vmem:[#allocation5 + $0x160] sm:$0xf]
    %v157 = vld [vmem:[#allocation5 + $0x164] sm:$0xf]
    %v158 = vld [vmem:[#allocation5 + $0x168] sm:$0xf]
    %v159 = vld [vmem:[#allocation5 + $0x16c] sm:$0xf]
    %v160 = vld [vmem:[#allocation5 + $0x170] sm:$0xf]
    %v161 = vld [vmem:[#allocation5 + $0x174] sm:$0xf]
    %v162 = vld [vmem:[#allocation5 + $0x178] sm:$0xf]
    %v163 = vld [vmem:[#allocation5 + $0x17c] sm:$0xf]
    %v164 = vld [vmem:[#allocation5 + $0x180] sm:$0xf]
    %v165 = vld [vmem:[#allocation5 + $0x184] sm:$0xf]
    %v166 = vld [vmem:[#allocation5 + $0x188] sm:$0xf]
    %v167 = vld [vmem:[#allocation5 + $0x18c] sm:$0xf]
    %v168 = vld [vmem:[#allocation5 + $0x190] sm:$0xf]
    %v169 = vld [vmem:[#allocation5 + $0x194] sm:$0xf]
    %v170 = vld [vmem:[#allocation5 + $0x198] sm:$0xf]
    %v171 = vld [vmem:[#allocation5 + $0x19c] sm:$0xf]
    %v172 = vld [vmem:[#allocation5 + $0x1a0] sm:$0xf]
    %v173 = vld [vmem:[#allocation5 + $0x1a4] sm:$0xf]
    %v174 = vld [vmem:[#allocation5 + $0x1a8] sm:$0xf]
    %v175 = vld [vmem:[#allocation5 + $0x1ac] sm:$0xf]
    %v176 = vld [vmem:[#allocation5 + $0x1b0] sm:$0xf]
    %v177 = vld [vmem:[#allocation5 + $0x1b4] sm:$0xf]
    %v178 = vld [vmem:[#allocation5 + $0x1b8] sm:$0xf]
    %v179 = vld [vmem:[#allocation5 + $0x1bc] sm:$0xf]
    %v180 = vld [vmem:[#allocation5 + $0x1c0] sm:$0xf]
    %v181 = vld [vmem:[#allocation5 + $0x1c4] sm:$0xf]
    %v182 = vld [vmem:[#allocation5 + $0x1c8] sm:$0xf]
    %v183 = vld [vmem:[#allocation5 + $0x1cc] sm:$0xf]
    %v184 = vld [vmem:[#allocation5 + $0x1d0] sm:$0xf]
    %v185 = vld [vmem:[#allocation5 + $0x1d4] sm:$0xf]
    %v186 = vld [vmem:[#allocation5 + $0x1d8] sm:$0xf]
    %v187 = vld [vmem:[#allocation5 + $0x1dc] sm:$0xf]
    %v188 = vld [vmem:[#allocation5 + $0x1e0] sm:$0xf]
    %v189 = vld [vmem:[#allocation5 + $0x1e4] sm:$0xf]
    %v190 = vld [vmem:[#allocation5 + $0x1e8] sm:$0xf]
    %v191 = vld [vmem:[#allocation5 + $0x1ec] sm:$0xf]
    %v192 = vld [vmem:[#allocation5 + $0x1f0] sm:$0xf]
    %v193 = vld [vmem:[#allocation5 + $0x1f4] sm:$0xf]
    %v194 = vld [vmem:[#allocation5 + $0x1f8] sm:$0xf]
    %v195 = vld [vmem:[#allocation5 + $0x1fc] sm:$0xf]
    %v196 = vld [vmem:[%s2] sm:$0x1]
    %v198 = vlaneseq
    %v199 = vshrl.u32 %v198, 7
    %v200 = vsub.s32 0, %v199
    %v201 = vrot.slane %v196, %v200
    %v211 = vunpack.c.l.b16 %v60
    %v212 = vunpack.c.h.b16 %v60
    %v213 = vunpack.c.l.b16 %v61
    %v214 = vunpack.c.h.b16 %v61
    %v215 = vunpack.c.l.b16 %v62
    %v216 = vunpack.c.h.b16 %v62
    %v217 = vunpack.c.l.b16 %v63
    %v218 = vunpack.c.h.b16 %v63
    %v219 = vunpack.c.l.b16 %v64
    %v220 = vunpack.c.h.b16 %v64
    %v221 = vunpack.c.l.b16 %v65
    %v222 = vunpack.c.h.b16 %v65
    %v223 = vunpack.c.l.b16 %v66
    %v224 = vunpack.c.h.b16 %v66
    %v225 = vunpack.c.l.b16 %v67
    %v226 = vunpack.c.h.b16 %v67
    %v227 = vpack.c.b16 %v219, %v211
    %v228 = vpack.c.b16 %v220, %v212
    %v229 = vpack.c.b16 %v221, %v213
    %v230 = vpack.c.b16 %v222, %v214
    %v231 = vpack.c.b16 %v223, %v215
    %v232 = vpack.c.b16 %v224, %v216
    %v233 = vpack.c.b16 %v225, %v217
    %v234 = vpack.c.b16 %v226, %v218
    %v371 = vunpack.c.l.b16 %v68
    %v372 = vunpack.c.l.b16 %v69
    %v373 = vunpack.c.l.b16 %v70
    %v374 = vunpack.c.l.b16 %v71
    %v375 = vunpack.c.l.b16 %v72
    %v376 = vunpack.c.l.b16 %v73
    %v377 = vunpack.c.l.b16 %v74
    %v378 = vunpack.c.l.b16 %v75
    %v379 = vunpack.c.l.b16 %v76
    %v380 = vunpack.c.l.b16 %v77
    %v381 = vunpack.c.l.b16 %v78
    %v382 = vunpack.c.l.b16 %v79
    %v383 = vunpack.c.l.b16 %v80
    %v384 = vunpack.c.l.b16 %v81
    %v385 = vunpack.c.l.b16 %v82
    %v386 = vunpack.c.l.b16 %v83
    %v387 = vunpack.c.l.b16 %v84
    %v388 = vunpack.c.l.b16 %v85
    %v389 = vunpack.c.l.b16 %v86
    %v390 = vunpack.c.l.b16 %v87
    %v391 = vunpack.c.l.b16 %v88
    %v392 = vunpack.c.l.b16 %v89
    %v393 = vunpack.c.l.b16 %v90
    %v394 = vunpack.c.l.b16 %v91
    %v395 = vunpack.c.l.b16 %v92
    %v396 = vunpack.c.l.b16 %v93
    %v397 = vunpack.c.l.b16 %v94
    %v398 = vunpack.c.l.b16 %v95
    %v399 = vunpack.c.l.b16 %v96
    %v400 = vunpack.c.l.b16 %v97
    %v401 = vunpack.c.l.b16 %v98
    %v402 = vunpack.c.l.b16 %v99
    %v403 = vunpack.c.l.b16 %v100
    %v404 = vunpack.c.l.b16 %v101
    %v405 = vunpack.c.l.b16 %v102
    %v406 = vunpack.c.l.b16 %v103
    %v407 = vunpack.c.l.b16 %v104
    %v408 = vunpack.c.l.b16 %v105
    %v409 = vunpack.c.l.b16 %v106
    %v410 = vunpack.c.l.b16 %v107
    %v411 = vunpack.c.l.b16 %v108
    %v412 = vunpack.c.l.b16 %v109
    %v413 = vunpack.c.l.b16 %v110
    %v414 = vunpack.c.l.b16 %v111
    %v415 = vunpack.c.l.b16 %v112
    %v416 = vunpack.c.l.b16 %v113
    %v417 = vunpack.c.l.b16 %v114
    %v418 = vunpack.c.l.b16 %v115
    %v419 = vunpack.c.l.b16 %v116
    %v420 = vunpack.c.l.b16 %v117
    %v421 = vunpack.c.l.b16 %v118
    %v422 = vunpack.c.l.b16 %v119
    %v423 = vunpack.c.l.b16 %v120
    %v424 = vunpack.c.l.b16 %v121
    %v425 = vunpack.c.l.b16 %v122
    %v426 = vunpack.c.l.b16 %v123
    %v427 = vunpack.c.l.b16 %v124
    %v428 = vunpack.c.l.b16 %v125
    %v429 = vunpack.c.l.b16 %v126
    %v430 = vunpack.c.l.b16 %v127
    %v431 = vunpack.c.l.b16 %v128
    %v432 = vunpack.c.l.b16 %v129
    %v433 = vunpack.c.l.b16 %v130
    %v434 = vunpack.c.l.b16 %v131
    %v435 = vunpack.c.l.b16 %v132
    %v436 = vunpack.c.l.b16 %v133
    %v437 = vunpack.c.l.b16 %v134
    %v438 = vunpack.c.l.b16 %v135
    %v439 = vunpack.c.l.b16 %v136
    %v440 = vunpack.c.l.b16 %v137
    %v441 = vunpack.c.l.b16 %v138
    %v442 = vunpack.c.l.b16 %v139
    %v443 = vunpack.c.l.b16 %v140
    %v444 = vunpack.c.l.b16 %v141
    %v445 = vunpack.c.l.b16 %v142
    %v446 = vunpack.c.l.b16 %v143
    %v447 = vunpack.c.l.b16 %v144
    %v448 = vunpack.c.l.b16 %v145
    %v449 = vunpack.c.l.b16 %v146
    %v450 = vunpack.c.l.b16 %v147
    %v451 = vunpack.c.l.b16 %v148
    %v452 = vunpack.c.l.b16 %v149
    %v453 = vunpack.c.l.b16 %v150
    %v454 = vunpack.c.l.b16 %v151
    %v455 = vunpack.c.l.b16 %v152
    %v456 = vunpack.c.l.b16 %v153
    %v457 = vunpack.c.l.b16 %v154
    %v458 = vunpack.c.l.b16 %v155
    %v459 = vunpack.c.l.b16 %v156
    %v460 = vunpack.c.l.b16 %v157
    %v461 = vunpack.c.l.b16 %v158
    %v462 = vunpack.c.l.b16 %v159
    %v463 = vunpack.c.l.b16 %v160
    %v464 = vunpack.c.l.b16 %v161
    %v465 = vunpack.c.l.b16 %v162
    %v466 = vunpack.c.l.b16 %v163
    %v467 = vunpack.c.l.b16 %v164
    %v468 = vunpack.c.l.b16 %v165
    %v469 = vunpack.c.l.b16 %v166
    %v470 = vunpack.c.l.b16 %v167
    %v471 = vunpack.c.l.b16 %v168
    %v472 = vunpack.c.l.b16 %v169
    %v473 = vunpack.c.l.b16 %v170
    %v474 = vunpack.c.l.b16 %v171
    %v475 = vunpack.c.l.b16 %v172
    %v476 = vunpack.c.l.b16 %v173
    %v477 = vunpack.c.l.b16 %v174
    %v478 = vunpack.c.l.b16 %v175
    %v479 = vunpack.c.l.b16 %v176
    %v480 = vunpack.c.l.b16 %v177
    %v481 = vunpack.c.l.b16 %v178
    %v482 = vunpack.c.l.b16 %v179
    %v483 = vunpack.c.l.b16 %v180
    %v484 = vunpack.c.l.b16 %v181
    %v485 = vunpack.c.l.b16 %v182
    %v486 = vunpack.c.l.b16 %v183
    %v487 = vunpack.c.l.b16 %v184
    %v488 = vunpack.c.l.b16 %v185
    %v489 = vunpack.c.l.b16 %v186
    %v490 = vunpack.c.l.b16 %v187
    %v491 = vunpack.c.l.b16 %v188
    %v492 = vunpack.c.l.b16 %v189
    %v493 = vunpack.c.l.b16 %v190
    %v494 = vunpack.c.l.b16 %v191
    %v495 = vunpack.c.l.b16 %v192
    %v496 = vunpack.c.l.b16 %v193
    %v497 = vunpack.c.l.b16 %v194
    %v498 = vunpack.c.l.b16 %v195
    %v499 = vpack.c.b16 %v372, %v371
    %v500 = vpack.c.b16 %v374, %v373
    %v501 = vpack.c.b16 %v376, %v375
    %v502 = vpack.c.b16 %v378, %v377
    %v503 = vpack.c.b16 %v380, %v379
    %v504 = vpack.c.b16 %v382, %v381
    %v505 = vpack.c.b16 %v384, %v383
    %v506 = vpack.c.b16 %v386, %v385
    %v507 = vpack.c.b16 %v388, %v387
    %v508 = vpack.c.b16 %v390, %v389
    %v509 = vpack.c.b16 %v392, %v391
    %v510 = vpack.c.b16 %v394, %v393
    %v511 = vpack.c.b16 %v396, %v395
    %v512 = vpack.c.b16 %v398, %v397
    %v513 = vpack.c.b16 %v400, %v399
    %v514 = vpack.c.b16 %v402, %v401
    %v515 = vpack.c.b16 %v404, %v403
    %v516 = vpack.c.b16 %v406, %v405
    %v517 = vpack.c.b16 %v408, %v407
    %v518 = vpack.c.b16 %v410, %v409
    %v519 = vpack.c.b16 %v412, %v411
    %v520 = vpack.c.b16 %v414, %v413
    %v521 = vpack.c.b16 %v416, %v415
    %v522 = vpack.c.b16 %v418, %v417
    %v523 = vpack.c.b16 %v420, %v419
    %v524 = vpack.c.b16 %v422, %v421
    %v525 = vpack.c.b16 %v424, %v423
    %v526 = vpack.c.b16 %v426, %v425
    %v527 = vpack.c.b16 %v428, %v427
    %v528 = vpack.c.b16 %v430, %v429
    %v529 = vpack.c.b16 %v432, %v431
    %v530 = vpack.c.b16 %v434, %v433
    %v531 = vpack.c.b16 %v436, %v435
    %v532 = vpack.c.b16 %v438, %v437
    %v533 = vpack.c.b16 %v440, %v439
    %v534 = vpack.c.b16 %v442, %v441
    %v535 = vpack.c.b16 %v444, %v443
    %v536 = vpack.c.b16 %v446, %v445
    %v537 = vpack.c.b16 %v448, %v447
    %v538 = vpack.c.b16 %v450, %v449
    %v539 = vpack.c.b16 %v452, %v451
    %v540 = vpack.c.b16 %v454, %v453
    %v541 = vpack.c.b16 %v456, %v455
    %v542 = vpack.c.b16 %v458, %v457
    %v543 = vpack.c.b16 %v460, %v459
    %v544 = vpack.c.b16 %v462, %v461
    %v545 = vpack.c.b16 %v464, %v463
    %v546 = vpack.c.b16 %v466, %v465
    %v547 = vpack.c.b16 %v468, %v467
    %v548 = vpack.c.b16 %v470, %v469
    %v549 = vpack.c.b16 %v472, %v471
    %v550 = vpack.c.b16 %v474, %v473
    %v551 = vpack.c.b16 %v476, %v475
    %v552 = vpack.c.b16 %v478, %v477
    %v553 = vpack.c.b16 %v480, %v479
    %v554 = vpack.c.b16 %v482, %v481
    %v555 = vpack.c.b16 %v484, %v483
    %v556 = vpack.c.b16 %v486, %v485
    %v557 = vpack.c.b16 %v488, %v487
    %v558 = vpack.c.b16 %v490, %v489
    %v559 = vpack.c.b16 %v492, %v491
    %v560 = vpack.c.b16 %v494, %v493
    %v561 = vpack.c.b16 %v496, %v495
    %v562 = vpack.c.b16 %v498, %v497
    %627 = vmatprep.subr.bf16.mxu0 0
    %628 = vmatpush1.bf16.msra.mxu0 %v506
    %629 = vmatprep.subr.bf16.mxu0 0
    %630 = vmatpush1.bf16.msra.mxu0 %v505
    %631 = vmatprep.subr.bf16.mxu0 0
    %632 = vmatpush1.bf16.msra.mxu0 %v504
    %633 = vmatprep.subr.bf16.mxu0 0
    %634 = vmatpush1.bf16.msra.mxu0 %v503
    %635 = vmatprep.subr.bf16.mxu0 0
    %636 = vmatpush1.bf16.msra.mxu0 %v502
    %637 = vmatprep.subr.bf16.mxu0 0
    %638 = vmatpush1.bf16.msra.mxu0 %v501
    %639 = vmatprep.subr.bf16.mxu0 0
    %640 = vmatpush1.bf16.msra.mxu0 %v500
    %641 = vmatprep.subr.bf16.mxu0 0
    %642 = vmatpush1.bf16.msra.mxu0 %v499
    %643 = vmatprep.subr.bf16.mxu0 0
    %644 = vmatpush2.bf16.msra.mxu0 %v514
    %645 = vmatprep.subr.bf16.mxu0 0
    %646 = vmatpush2.bf16.msra.mxu0 %v513
    %647 = vmatprep.subr.bf16.mxu0 0
    %648 = vmatpush2.bf16.msra.mxu0 %v512
    %649 = vmatprep.subr.bf16.mxu0 0
    %650 = vmatpush2.bf16.msra.mxu0 %v511
    %651 = vmatprep.subr.bf16.mxu0 0
    %652 = vmatpush2.bf16.msra.mxu0 %v510
    %653 = vmatprep.subr.bf16.mxu0 0
    %654 = vmatpush2.bf16.msra.mxu0 %v509
    %655 = vmatprep.subr.bf16.mxu0 0
    %656 = vmatpush2.bf16.msra.mxu0 %v508
    %657 = vmatprep.subr.bf16.mxu0 0
    %658 = vmatpush2.bf16.msra.mxu0 %v507
    %659 = vmatprep.mubr.bf16.mxu0 %v228
    %660 = vmatmul.mubr.bf16.gmra.mxu0 %v227
    %v661 = vpop.f32.mrf.mxu0
    %v662 = vadd.f32 %v201, %v661
    %v663 = vpop.f32.mrf.mxu0
    %v664 = vpop.f32.mrf.mxu0
    %v665 = vadd.f32 %v201, %v664
    %v666 = vpop.f32.mrf.mxu0
    %667 = vdwg.mxu0
    %668 = vmatprep.subr.bf16.mxu0 0
    %669 = vmatpush1.bf16.msra.mxu0 %v522
    %670 = vmatprep.subr.bf16.mxu0 0
    %671 = vmatpush1.bf16.msra.mxu0 %v521
    %672 = vmatprep.subr.bf16.mxu0 0
    %673 = vmatpush1.bf16.msra.mxu0 %v520
    %674 = vmatprep.subr.bf16.mxu0 0
    %675 = vmatpush1.bf16.msra.mxu0 %v519
    %676 = vmatprep.subr.bf16.mxu0 0
    %677 = vmatpush1.bf16.msra.mxu0 %v518
    %678 = vmatprep.subr.bf16.mxu0 0
    %679 = vmatpush1.bf16.msra.mxu0 %v517
    %680 = vmatprep.subr.bf16.mxu0 0
    %681 = vmatpush1.bf16.msra.mxu0 %v516
    %682 = vmatprep.subr.bf16.mxu0 0
    %683 = vmatpush1.bf16.msra.mxu0 %v515
    %684 = vmatprep.subr.bf16.mxu0 0
    %685 = vmatpush2.bf16.msra.mxu0 %v530
    %686 = vmatprep.subr.bf16.mxu0 0
    %687 = vmatpush2.bf16.msra.mxu0 %v529
    %688 = vmatprep.subr.bf16.mxu0 0
    %689 = vmatpush2.bf16.msra.mxu0 %v528
    %690 = vmatprep.subr.bf16.mxu0 0
    %691 = vmatpush2.bf16.msra.mxu0 %v527
    %692 = vmatprep.subr.bf16.mxu0 0
    %693 = vmatpush2.bf16.msra.mxu0 %v526
    %694 = vmatprep.subr.bf16.mxu0 0
    %695 = vmatpush2.bf16.msra.mxu0 %v525
    %696 = vmatprep.subr.bf16.mxu0 0
    %697 = vmatpush2.bf16.msra.mxu0 %v524
    %698 = vmatprep.subr.bf16.mxu0 0
    %699 = vmatpush2.bf16.msra.mxu0 %v523
    %700 = vmatprep.mubr.bf16.mxu0 %v230
    %701 = vmatmul.mubr.bf16.gmra.mxu0 %v229
    %v702 = vpop.f32.mrf.mxu0
    %v703 = vadd.f32 %v662, %v702
    %v704 = vpop.f32.mrf.mxu0
    %v705 = vpop.f32.mrf.mxu0
    %v706 = vadd.f32 %v665, %v705
    %v707 = vpop.f32.mrf.mxu0
    %708 = vdwg.mxu0
    %709 = vmatprep.subr.bf16.mxu0 0
    %710 = vmatpush1.bf16.msra.mxu0 %v538
    %711 = vmatprep.subr.bf16.mxu0 0
    %712 = vmatpush1.bf16.msra.mxu0 %v537
    %713 = vmatprep.subr.bf16.mxu0 0
    %714 = vmatpush1.bf16.msra.mxu0 %v536
    %715 = vmatprep.subr.bf16.mxu0 0
    %716 = vmatpush1.bf16.msra.mxu0 %v535
    %717 = vmatprep.subr.bf16.mxu0 0
    %718 = vmatpush1.bf16.msra.mxu0 %v534
    %719 = vmatprep.subr.bf16.mxu0 0
    %720 = vmatpush1.bf16.msra.mxu0 %v533
    %721 = vmatprep.subr.bf16.mxu0 0
    %722 = vmatpush1.bf16.msra.mxu0 %v532
    %723 = vmatprep.subr.bf16.mxu0 0
    %724 = vmatpush1.bf16.msra.mxu0 %v531
    %725 = vmatprep.subr.bf16.mxu0 0
    %726 = vmatpush2.bf16.msra.mxu0 %v546
    %727 = vmatprep.subr.bf16.mxu0 0
    %728 = vmatpush2.bf16.msra.mxu0 %v545
    %729 = vmatprep.subr.bf16.mxu0 0
    %730 = vmatpush2.bf16.msra.mxu0 %v544
    %731 = vmatprep.subr.bf16.mxu0 0
    %732 = vmatpush2.bf16.msra.mxu0 %v543
    %733 = vmatprep.subr.bf16.mxu0 0
    %734 = vmatpush2.bf16.msra.mxu0 %v542
    %735 = vmatprep.subr.bf16.mxu0 0
    %736 = vmatpush2.bf16.msra.mxu0 %v541
    %737 = vmatprep.subr.bf16.mxu0 0
    %738 = vmatpush2.bf16.msra.mxu0 %v540
    %739 = vmatprep.subr.bf16.mxu0 0
    %740 = vmatpush2.bf16.msra.mxu0 %v539
    %741 = vmatprep.mubr.bf16.mxu0 %v232
    %742 = vmatmul.mubr.bf16.gmra.mxu0 %v231
    %v743 = vpop.f32.mrf.mxu0
    %v744 = vadd.f32 %v703, %v743
    %v745 = vpop.f32.mrf.mxu0
    %v746 = vpop.f32.mrf.mxu0
    %v747 = vadd.f32 %v706, %v746
    %v748 = vpop.f32.mrf.mxu0
    %749 = vdwg.mxu0
    %750 = vmatprep.subr.bf16.mxu0 0
    %751 = vmatpush1.bf16.msra.mxu0 %v554
    %752 = vmatprep.subr.bf16.mxu0 0
    %753 = vmatpush1.bf16.msra.mxu0 %v553
    %754 = vmatprep.subr.bf16.mxu0 0
    %755 = vmatpush1.bf16.msra.mxu0 %v552
    %756 = vmatprep.subr.bf16.mxu0 0
    %757 = vmatpush1.bf16.msra.mxu0 %v551
    %758 = vmatprep.subr.bf16.mxu0 0
    %759 = vmatpush1.bf16.msra.mxu0 %v550
    %760 = vmatprep.subr.bf16.mxu0 0
    %761 = vmatpush1.bf16.msra.mxu0 %v549
    %762 = vmatprep.subr.bf16.mxu0 0
    %763 = vmatpush1.bf16.msra.mxu0 %v548
    %764 = vmatprep.subr.bf16.mxu0 0
    %765 = vmatpush1.bf16.msra.mxu0 %v547
    %766 = vmatprep.subr.bf16.mxu0 0
    %767 = vmatpush2.bf16.msra.mxu0 %v562
    %768 = vmatprep.subr.bf16.mxu0 0
    %769 = vmatpush2.bf16.msra.mxu0 %v561
    %770 = vmatprep.subr.bf16.mxu0 0
    %771 = vmatpush2.bf16.msra.mxu0 %v560
    %772 = vmatprep.subr.bf16.mxu0 0
    %773 = vmatpush2.bf16.msra.mxu0 %v559
    %774 = vmatprep.subr.bf16.mxu0 0
    %775 = vmatpush2.bf16.msra.mxu0 %v558
    %776 = vmatprep.subr.bf16.mxu0 0
    %777 = vmatpush2.bf16.msra.mxu0 %v557
    %778 = vmatprep.subr.bf16.mxu0 0
    %779 = vmatpush2.bf16.msra.mxu0 %v556
    %780 = vmatprep.subr.bf16.mxu0 0
    %781 = vmatpush2.bf16.msra.mxu0 %v555
    %782 = vmatprep.mubr.bf16.mxu0 %v234
    %783 = vmatmul.mubr.bf16.gmra.mxu0 %v233
    %v784 = vpop.f32.mrf.mxu0
    %v785 = vadd.f32 %v744, %v784
    %v786 = vpop.f32.mrf.mxu0
    %v787 = vpop.f32.mrf.mxu0
    %v788 = vadd.f32 %v747, %v787
    %v789 = vpop.f32.mrf.mxu0
    %790 = vdwg.mxu0
    %v791 = vlaneseq
    %v792 = vand.u32 %v791, 127
    %vm793 = vcmp.lt.s32.totalorder %v792, 10
    %v794 = vmul.f32 %v785, 0.16666667
    %v795 = vmul.f32 %v788, 0.16666667
    %v796 = vsel %vm793, %v794, -1e+30
    %v797 = vsel %vm793, %v795, -1e+30
    %798 = vmax.xlane.f32.xlu0 %v796
    %v799 = vpop.xlane.xlu0 %798
    %800 = vmax.xlane.f32.xlu0 %v797
    %v801 = vpop.xlane.xlu0 %800
    %v802 = vsub.f32 %v796, %v799
    %v803 = vsub.f32 %v797, %v801
    %v804 = vmul.f32 %v802, 1.442695
    %v805 = vpow.pop %v804
    %v806 = vmul.f32 %v803, 1.442695
    %v807 = vpow.pop %v806
    %808 = vadd.xlane.f32.xlu0 %v805
    %v809 = vpop.xlane.xlu0 %808
    %810 = vadd.xlane.f32.xlu0 %v807
    %v811 = vpop.xlane.xlu0 %810
    %v812 = vrcp.pop %v809
    %v813 = vrcp.pop %v811
    %v814 = vmul.f32 %v812, %v812
    %v815 = vmul.f32 %v813, %v813
    %v816 = vmul.f32 %v814, 0.9
    %v817 = vmul.f32 %v815, 0.9
    %v818 = vadd.f32 %v816, 0.3
    %v819 = vadd.f32 %v817, 0.3
    %v820 = vld [vmem:[#allocation7] sm:$0xf]
    %v821 = vld [vmem:[#allocation7 + $0x4] sm:$0xf]
    %v822 = vunpack.c.l.bf16 %v820
    %v823 = vunpack.c.l.bf16 %v821
    %v824 = vmul.f32 %v822, %v818
    %v825 = vmul.f32 %v823, %v819
    %v826 = vadd.f32 %v796, %v824
    %v827 = vadd.f32 %v797, %v825
    %828 = vmax.xlane.f32.xlu0 %v826
    %v829 = vpop.xlane.xlu0 %828
    %830 = vmax.xlane.f32.xlu0 %v827
    %v831 = vpop.xlane.xlu0 %830
    %v832 = vsub.f32 %v826, %v829
    %v833 = vsub.f32 %v827, %v831
    %v834 = vmul.f32 %v832, 1.442695
    %v835 = vpow.pop %v834
    %v836 = vmul.f32 %v833, 1.442695
    %v837 = vpow.pop %v836
    %838 = vadd.xlane.f32.xlu0 %v835
    %v839 = vpop.xlane.xlu0 %838
    %840 = vadd.xlane.f32.xlu0 %v837
    %v841 = vpop.xlane.xlu0 %840
    %v842 = vrcp.pop %v839
    %v843 = vrcp.pop %v841
    %v844 = vmul.f32 %v835, %v842
    %v845 = vmul.f32 %v837, %v843
    %v846 = vmax.f32 %v844, 0.0
    %v847 = vmax.f32 %v845, 0.0
    %v848 = vmin.f32 %v846, 0.6
    %v849 = vmin.f32 %v847, 0.6
    %850 = vadd.xlane.f32.xlu0 %v848
    %v851 = vpop.xlane.xlu0 %850
    %852 = vadd.xlane.f32.xlu0 %v849
    %v853 = vpop.xlane.xlu0 %852
    %v854 = vrcp.pop %v851
    %v855 = vrcp.pop %v853
    %v856 = vmul.f32 %v848, %v854
    %v857 = vmul.f32 %v849, %v855
    %v858 = vmul.f32 %v856, 10.0
    %v859 = vmul.f32 %v857, 10.0
    %v860 = vround.ne.pseudo %v858
    %v861 = vround.ne.pseudo %v859
    %v862 = vmul.f32 %v860, 0.1
    %v863 = vmul.f32 %v861, 0.1
    %864 = vadd.xlane.f32.xlu0 %v862
    %v865 = vpop.xlane.xlu0 %864
    %866 = vadd.xlane.f32.xlu0 %v863
    %v867 = vpop.xlane.xlu0 %866
    %v868 = vsel %vm793, 0.1, 0.0
    %vm869 = vcmp.eq.f32.partialorder %v865, 0.0
    %vm870 = vcmp.eq.f32.partialorder %v867, 0.0
    %v871 = vsel %vm869, 1, 0
    %v872 = vsel %vm870, 1, 0
    %vm873 = vcmp.eq.s32.totalorder %v871, 1
    %vm874 = vcmp.eq.s32.totalorder %v872, 1
    %v875 = vsel %vm873, %v868, %v862
    %v876 = vsel %vm874, %v868, %v863
    %877 = vadd.xlane.f32.xlu0 %v875
    %v878 = vpop.xlane.xlu0 %877
    %879 = vadd.xlane.f32.xlu0 %v876
    %v880 = vpop.xlane.xlu0 %879
    %v881 = vrcp.pop %v878
    %v882 = vrcp.pop %v880
    %v883 = vmul.f32 %v875, %v881
    %v884 = vmul.f32 %v876, %v882
    %v885 = vmax.f32 %v883, 1e-06
    %v886 = vmax.f32 %v884, 1e-06
    %v887 = vlog2.pop %v885
    %v888 = vmul.f32 %v887, 0.6931472
    %v889 = vlog2.pop %v886
    %v890 = vmul.f32 %v889, 0.6931472
    %891 = vst [vmem:[#allocation8] sm:$0xff] %v888
    %892 = vst [vmem:[#allocation8 + $0x8] sm:$0xff] %v890
    // Predicated region
    $region30: #{tpu_custom_call.1} parent=1 // pred_check
      _
    $region31: #{tpu_custom_call.1} parent=1 // pred_check_branch
      %894 = sbr.rel (0) target = $region33
    $region32: #{tpu_custom_call.1} parent=1 // pred_region
      %s896 = ssub.s32 256, 256
      %897 = vsyncadd [#allocation4], %s896
      %s898 = sshll.u32 [#allocation8], 4
      %s899 = int_to_ptr.vmem [resolvable:$true] %s898
      %904 = dma.vmem_to_hbm [thread:$0]  %s899, 256, %s4, [#allocation4], 128, 128, 8
    $region33: #{tpu_custom_call.1} parent=1 // pred_fallthru
      _
    // Predicated region
    $region34: #{tpu_custom_call.1} parent=1 // pred_check
      _
    $region35: #{tpu_custom_call.1} parent=1 // pred_check_branch
      %906 = sbr.rel (0) target = $region37
    $region36: #{tpu_custom_call.1} parent=1 // pred_region
      %907 = dma.done [#allocation4], 256
    $region37: #{tpu_custom_call.1} parent=1 // pred_fallthru
      _
    %908 = vsyncpa [#allocation3], 1
    %909 = vsyncpa [#allocation6], 1
    %910 = vsyncpa [#allocation4], 1

</llo_original>
